<compile_context>
chip_gen: v6e
topology: v6e:2x2x1
jax: 0.10.0
libtpu: 0.0.40
codegen_flags: <defaults>
</compile_context>

<pallas_src>
import functools

import jax
import jax.numpy as jnp
from jax import lax
from jax.experimental import pallas as pl
from jax.experimental.pallas import tpu as pltpu


# --------------------------- VMEM budgeting ---------------------------------
def _round_up(v, m):
    return ((v + m - 1) // m) * m


def _vmem_limit_bytes():
    """Generation-aware scoped-VMEM request."""
    phys = None
    try:
        info = pltpu.get_tpu_info()
        for name in ("vmem_capacity_bytes", "vmem_size_bytes", "vmem_bytes"):
            v = getattr(info, name, None)
            if v:
                phys = int(v)
                break
    except Exception:
        phys = None
    if phys is None:
        # Unknown hardware: fall back to a limit that is safe everywhere.
        return 32 * 1024 * 1024
    if phys <= 80 * 1024 * 1024:          # v7x-class: 64 MiB physical per TC
        limit = 40 * 1024 * 1024
    else:                                  # v5e / v6e: 128 MiB physical
        limit = 96 * 1024 * 1024
    return min(limit, int(phys * 0.75))


def _fused_slab_cap_bytes(vmem_limit, itemsize, in_bufs, out_bufs):
    """Largest per-batch (S, C) slab (in native-dtype bytes) the fused kernel
    can take: `in_bufs + out_bufs` pipelined copies of the slab plus ~2
    f32-sized in-kernel temps (squared slab for the reduction, f32 product
    before the output cast)."""
    f32_factor = 4.0 / itemsize
    mult = in_bufs + out_bufs + 2.0 * f32_factor
    return int(0.9 * vmem_limit / mult)


def _two_pass_tile_rows(vmem_limit, itemsize, c_pad, S, *, pass2, override=None):
    """Pick a multiple-of-8 spatial tile height for the tiled path."""
    max_rows = max(8, (S // 8) * 8)
    if override is not None:
        return min(max(8, (int(override) // 8) * 8), max_rows)
    f32_factor = 4.0 / itemsize
    if pass2:
        # 2x in + 2x out buffers + ~2 f32 temps per tile.
        cap = min(8 * 1024 * 1024, 0.9 * vmem_limit / (4 + 2 * f32_factor))
    else:
        # input-only double buffering + ~1 f32 temp (+ tiny (8,C) accumulator).
        cap = min(8 * 1024 * 1024, 0.9 * vmem_limit / (2 + f32_factor))
    rows = int(cap // (c_pad * itemsize))
    rows = max(8, (rows // 8) * 8)
    return min(rows, max_rows)


# --------------------------- small helpers -----------------------------------
def _rowsum8(sq):
    """Reduce an (S, C) array of squares to (8, C) with VPU-only vreg adds."""
    s, c = sq.shape
    pad = (-s) % 8
    if pad:
        # TODO(synk): only hit when S is not a multiple of 8 on the fused path.
        sq = jnp.concatenate([sq, jnp.zeros((pad, c), sq.dtype)], axis=0)
    return jnp.sum(sq.reshape(-1, 8, c), axis=0)


# --------------------------- fused single-pass kernel ------------------------
def _grn_fused_kernel(x_ref, gamma_ref, *rest, use_bias, c_true):
    if use_bias:
        beta_ref, out_ref = rest
    else:
        (out_ref,) = rest
    # Re-read x_ref per use so no full f32 slab stays live across both uses.
    sq = jnp.square(x_ref[0].astype(jnp.float32))          # (S, C)
    part = _rowsum8(sq)                                     # (8, C)  VPU-only
    sumsq = jnp.sum(part, axis=0, keepdims=True)            # (1, C)  one XLU reduce
    gx = jnp.sqrt(sumsq)                                    # (1, C)
    # channel mean over the TRUE channel count (padded channels are zero).
    gmean = jnp.sum(gx, axis=-1, keepdims=True) * (1.0 / float(c_true))
    nx = gx / (gmean + 1e-6)
    scale = gamma_ref[0] * nx + 1.0                         # (1, C)
    res = x_ref[0].astype(jnp.float32) * scale              # (S, C)
    if use_bias:
        res = res + beta_ref[0]
    out_ref[0] = res.astype(out_ref.dtype)


def _fused_call(x_flat, gamma_f, beta_f, out_dtype, *, single_buffer, c_true,
                vmem_limit):
    n, s, c = x_flat.shape
    use_bias = beta_f is not None
    kernel = functools.partial(_grn_fused_kernel, use_bias=use_bias,
                               c_true=c_true)
    slab_kw = {}
    if single_buffer:
        # length-1 grid cannot pipeline -> single-buffer the big slab.
        slab_kw = dict(pipeline_mode=pl.Buffered(1))
    in_specs = [pl.BlockSpec((1, s, c), lambda i: (i, 0, 0), **slab_kw),
                pl.BlockSpec((1, 1, c), lambda i: (0, 0, 0))]
    args = [x_flat, gamma_f]
    if use_bias:
        in_specs.append(pl.BlockSpec((1, 1, c), lambda i: (0, 0, 0)))
        args.append(beta_f)
    out_spec = pl.BlockSpec((1, s, c), lambda i: (i, 0, 0), **slab_kw)
    fn = pl.pallas_call(
        kernel,
        out_shape=jax.ShapeDtypeStruct((n, s, c), out_dtype),
        grid_spec=pltpu.PrefetchScalarGridSpec(
            num_scalar_prefetch=0,
            grid=(n,),
            in_specs=in_specs,
            out_specs=out_spec),
        compiler_params=pltpu.CompilerParams(
            dimension_semantics=("parallel",),
            vmem_limit_bytes=vmem_limit),
    )
    return fn(*args)


# --------------------------- pass 1: partial sum of squares ------------------
def _sumsq_partial_kernel(x_ref, out_ref, *, tile_s, tiles_per_chunk, s_total):
    @pl.when(pl.program_id(2) == 0)
    def _():
        out_ref[...] = jnp.zeros_like(out_ref)

    # Logical (unclamped) tile index -> mask ragged / phantom rows to zero.
    lt = pl.program_id(1) * tiles_per_chunk + pl.program_id(2)
    start = lt * tile_s
    rows = lax.broadcasted_iota(jnp.int32, (tile_s, 1), 0)
    valid = (start + rows) < s_total                         # (tile_s, 1)

    xf = x_ref[0].astype(jnp.float32)                        # (tile_s, C)
    sq = jnp.where(valid, xf * xf, 0.0)
    part = jnp.sum(sq.reshape(tile_s // 8, 8, -1), axis=0)   # (8, C) VPU-only
    out_ref[...] += part.reshape(1, 1, 8, part.shape[-1])


# --------------------------- pass 2: apply precomputed scale / bias ----------
def _apply_kernel(x_ref, scale_ref, *rest, use_bias):
    if use_bias:
        beta_ref, out_ref = rest
    else:
        (out_ref,) = rest
    res = x_ref[...].astype(jnp.float32) * scale_ref[...]
    if use_bias:
        res = res + beta_ref[...]
    out_ref[...] = res.astype(out_ref.dtype)


# --------------------------- public wrapper ----------------------------------
def grn_nhwzc(x, gamma, beta=None, *, force_two_pass=False,
              two_pass_tile_rows=None):
    """x: (N, H, W, Z, C); gamma/beta: (1,1,1,1,C). Returns x's shape/dtype."""
    N, H, W, Z, C = x.shape
    S = H * W * Z
    itemsize = jnp.dtype(x.dtype).itemsize
    vmem_limit = _vmem_limit_bytes()

    # Keep C lane-dense: pad the channel axis to a multiple of 128.
    # TODO(synk): for very large x with C % 128 != 0 the pad/slice copies add
    # one extra HBM round trip; a masked-store variant could avoid it.
    C_pad = _round_up(C, 128)
    x_flat = x.reshape(N, S, C)
    gamma_f = gamma.reshape(1, 1, C).astype(jnp.float32)
    beta_f = None if beta is None else beta.reshape(1, 1, C).astype(jnp.float32)
    if C_pad != C:
        padc = C_pad - C
        x_flat = jnp.pad(x_flat, ((0, 0), (0, 0), (0, padc)))
        gamma_f = jnp.pad(gamma_f, ((0, 0), (0, 0), (0, padc)))
        if beta_f is not None:
            beta_f = jnp.pad(beta_f, ((0, 0), (0, 0), (0, padc)))
    use_bias = beta_f is not None

    def _unflatten(out_flat):
        if C_pad != C:
            out_flat = out_flat[..., :C]
        return out_flat.reshape(N, H, W, Z, C)

    slab_bytes = S * C_pad * itemsize
    single = (N == 1)
    bufs = 1 if single else 2
    fused_cap = _fused_slab_cap_bytes(vmem_limit, itemsize, bufs, bufs)
    use_fused = (S < 8) or (not force_two_pass and slab_bytes <= fused_cap)

    if use_fused:
        out_flat = None
        if single:
            try:
                out_flat = _fused_call(x_flat, gamma_f, beta_f, x.dtype,
                                       single_buffer=True, c_true=C,
                                       vmem_limit=vmem_limit)
            except Exception:
                out_flat = None   # pl.Buffered(1) rejected -> retry double-buffered
        if out_flat is None:
            out_flat = _fused_call(x_flat, gamma_f, beta_f, x.dtype,
                                   single_buffer=False, c_true=C,
                                   vmem_limit=vmem_limit)
        return _unflatten(out_flat)

    # ---- two-pass fallback for large per-batch slabs -------------------------
    # Pass 1: partial sums of squares (spatial split into 2 parallel chunks).
    tile1 = _two_pass_tile_rows(vmem_limit, itemsize, C_pad, S, pass2=False,
                                override=two_pass_tile_rows)
    n_tiles1 = pl.cdiv(S, tile1)
    n_chunks = 2 if n_tiles1 >= 2 else 1
    tiles_per_chunk = pl.cdiv(n_tiles1, n_chunks)

    p1_kernel = functools.partial(_sumsq_partial_kernel, tile_s=tile1,
                                  tiles_per_chunk=tiles_per_chunk, s_total=S)
    partial = pl.pallas_call(
        p1_kernel,
        out_shape=jax.ShapeDtypeStruct((N, n_chunks, 8, C_pad), jnp.float32),
        grid_spec=pltpu.PrefetchScalarGridSpec(
            num_scalar_prefetch=0,
            grid=(N, n_chunks, tiles_per_chunk),
            in_specs=[pl.BlockSpec(
                (1, tile1, C_pad),
                # Clamp the block index; phantom / ragged rows are masked
                # to zero inside the kernel.
                lambda n, ch, t, tpc=tiles_per_chunk, nt=n_tiles1:
                    (n, jnp.minimum(ch * tpc + t, nt - 1), 0))],
            out_specs=pl.BlockSpec((1, 1, 8, C_pad),
                                   lambda n, ch, t: (n, ch, 0, 0)),
        ),
        compiler_params=pltpu.CompilerParams(
            dimension_semantics=("parallel", "parallel", "arbitrary"),
            vmem_limit_bytes=vmem_limit),
    )(x_flat)

    # Tiny (N, C) epilogue in plain JAX: 8->1 reduce, sqrt, channel mean,
    # scale = gamma*Nx + 1.  Padded channels contribute zero to the sum, so
    # divide by the true channel count.
    sumsq = jnp.sum(partial, axis=(1, 2))                                # (N, C_pad)
    gx = jnp.sqrt(sumsq)
    gmean = jnp.sum(gx, axis=-1, keepdims=True) * (1.0 / float(C))
    nx = gx / (gmean + 1e-6)
    scale = (gamma_f.reshape(1, C_pad) * nx + 1.0).reshape(N, 1, C_pad)
    scale = scale.astype(jnp.float32)

    # Pass 2: apply scale (+ bias) with large lane-dense tiles; ragged last
    # tile reads are harmless (out-of-range writes are dropped).
    tile2 = _two_pass_tile_rows(vmem_limit, itemsize, C_pad, S, pass2=True,
                                override=two_pass_tile_rows)
    n_tiles2 = pl.cdiv(S, tile2)

    p2_kernel = functools.partial(_apply_kernel, use_bias=use_bias)
    in_specs = [pl.BlockSpec((1, tile2, C_pad), lambda n, s: (n, s, 0)),  # x
                pl.BlockSpec((1, 1, C_pad), lambda n, s: (n, 0, 0))]      # scale
    args = [x_flat, scale]
    if use_bias:
        in_specs.append(pl.BlockSpec((1, 1, C_pad), lambda n, s: (0, 0, 0)))
        args.append(beta_f)

    out_flat = pl.pallas_call(
        p2_kernel,
        out_shape=jax.ShapeDtypeStruct((N, S, C_pad), x.dtype),
        grid_spec=pltpu.PrefetchScalarGridSpec(
            num_scalar_prefetch=0,
            grid=(N, n_tiles2),
            in_specs=in_specs,
            out_specs=pl.BlockSpec((1, tile2, C_pad), lambda n, s: (n, s, 0)),
        ),
        compiler_params=pltpu.CompilerParams(
            dimension_semantics=("parallel", "parallel"),
            vmem_limit_bytes=vmem_limit),
    )(*args)

    return _unflatten(out_flat)


# --------------------------- pure-JAX reference ------------------------------
def grn_reference(x, gamma, beta=None):
    xf = x.astype(jnp.float32)
    gx = jnp.sqrt(jnp.sum(xf * xf, axis=(1, 2, 3), keepdims=True))
    nx = gx / (jnp.mean(gx, axis=-1, keepdims=True) + 1e-6)
    out = (gamma.astype(jnp.float32) * nx + 1.0) * xf
    if beta is not None:
        out = out + beta.astype(jnp.float32)
    return out.astype(x.dtype)


if __name__ == "__main__":
    # Small shapes consistent with the module: x is (N, H, W, Z, C).
    N, H, W, Z, C = 2, 8, 8, 4, 128

    key = jax.random.PRNGKey(0)
    kx, kg, kb = jax.random.split(key, 3)
    x = jax.random.normal(kx, (N, H, W, Z, C), dtype=jnp.float32)
    # Module inits gamma/beta to zeros; use small non-zero values so the GRN
    # math is actually exercised.
    gamma = 0.1 * jax.random.normal(kg, (1, 1, 1, 1, C), dtype=jnp.float32)
    beta = 0.1 * jax.random.normal(kb, (1, 1, 1, 1, C), dtype=jnp.float32)

    ref = grn_reference(x, gamma, beta)

    # 1) Fused single-pass path (per-batch slab fits VMEM).
    out_fused = jax.block_until_ready(grn_nhwzc(x, gamma, beta))
    assert out_fused.shape == x.shape and out_fused.dtype == x.dtype
    assert jnp.allclose(out_fused, ref, atol=1e-4, rtol=1e-4), "fused mismatch"

    # 2) Two-pass tiled fallback with a ragged last tile + phantom chunk tile
    #    (tile=40 rows over S=256 -> 7 tiles, 2 chunks of 4).
    out_two = jax.block_until_ready(
        grn_nhwzc(x, gamma, beta, force_two_pass=True, two_pass_tile_rows=40))
    assert jnp.allclose(out_two, ref, atol=1e-4, rtol=1e-4), "two-pass mismatch"

    # 3) N == 1 exercises the single-buffered fused slab (pl.Buffered(1)).
    x1 = x[:1]
    out_n1 = jax.block_until_ready(grn_nhwzc(x1, gamma, beta))
    assert jnp.allclose(out_n1, grn_reference(x1, gamma, beta),
                        atol=1e-4, rtol=1e-4), "N=1 mismatch"

    # 4) use_bias = False specialization.
    out_nb = jax.block_until_ready(grn_nhwzc(x, gamma, None))
    assert jnp.allclose(out_nb, grn_reference(x, gamma, None),
                        atol=1e-4, rtol=1e-4), "no-bias mismatch"

    # 5) Non-multiple-of-128 channel count -> lane padding path (C=64).
    k2 = jax.random.PRNGKey(1)
    k2x, k2g, k2b = jax.random.split(k2, 3)
    x2 = jax.random.normal(k2x, (1, 4, 4, 2, 64), dtype=jnp.float32)
    g2 = 0.1 * jax.random.normal(k2g, (1, 1, 1, 1, 64), dtype=jnp.float32)
    b2 = 0.1 * jax.random.normal(k2b, (1, 1, 1, 1, 64), dtype=jnp.float32)
    out_c64 = jax.block_until_ready(grn_nhwzc(x2, g2, b2))
    assert out_c64.shape == x2.shape
    assert jnp.allclose(out_c64, grn_reference(x2, g2, b2),
                        atol=1e-4, rtol=1e-4), "C=64 mismatch"

    # 6) bf16 inputs (f32 accumulation in-kernel).
    x_bf = x.astype(jnp.bfloat16)
    out_bf = jax.block_until_ready(grn_nhwzc(x_bf, gamma, beta))
    ref_bf = grn_reference(x_bf, gamma, beta)
    assert out_bf.dtype == jnp.bfloat16
    assert jnp.allclose(out_bf.astype(jnp.float32), ref_bf.astype(jnp.float32),
                        atol=5e-2, rtol=5e-2), "bf16 mismatch"

    print("KERNEL_OK")
</pallas_src>

<mosaic_0001>
module attributes {stable_mosaic.version = 11 : i64} {
  func.func @_grn_fused_kernel(%arg0: i32, %arg1: memref<1x256x128xf32, #tpu.memory_space<vmem>>, %arg2: memref<1x1x128xf32, #tpu.memory_space<vmem>>, %arg3: memref<1x1x128xf32, #tpu.memory_space<vmem>>, %arg4: memref<1x256x128xf32, #tpu.memory_space<vmem>>) attributes {dimension_semantics = [#tpu.dimension_semantics<parallel>], iteration_bounds = array<i64: 2>, scalar_prefetch = 0 : i64, scratch_operands = 0 : i64, tpu.core_type = #tpu.core_type<tc>, window_params = [{transform_indices = @transform_0, window_bounds = array<i64: 1, 256, 128>}, {pipeline_mode = #tpu.pipeline_mode<synchronous>, transform_indices = @transform_1, window_bounds = array<i64: 1, 1, 128>}, {pipeline_mode = #tpu.pipeline_mode<synchronous>, transform_indices = @transform_2, window_bounds = array<i64: 1, 1, 128>}, {transform_indices = @transform_3, window_bounds = array<i64: 1, 256, 128>}]} {
    %c0 = arith.constant 0 : index
    %c0_0 = arith.constant 0 : index
    %c0_1 = arith.constant 0 : index
    %0 = vector.load %arg1[%c0, %c0_0, %c0_1] : memref<1x256x128xf32, #tpu.memory_space<vmem>>, vector<1x256x128xf32>
    %1 = vector.shape_cast %0 : vector<1x256x128xf32> to vector<256x128xf32>
    %2 = arith.mulf %1, %1 : vector<256x128xf32>
    %3 = vector.shape_cast %2 : vector<256x128xf32> to vector<32x8x128xf32>
    %cst = arith.constant dense<0.000000e+00> : vector<8x128xf32>
    %4 = vector.multi_reduction <add>, %3, %cst [0] : vector<32x8x128xf32> to vector<8x128xf32>
    %cst_2 = arith.constant dense<0.000000e+00> : vector<128xf32>
    %5 = vector.multi_reduction <add>, %4, %cst_2 [0] : vector<8x128xf32> to vector<128xf32>
    %6 = vector.shape_cast %5 : vector<128xf32> to vector<1x128xf32>
    %7 = math.sqrt %6 : vector<1x128xf32>
    %cst_3 = arith.constant dense<0.000000e+00> : vector<1xf32>
    %8 = vector.multi_reduction <add>, %7, %cst_3 [1] : vector<1x128xf32> to vector<1xf32>
    %9 = vector.shape_cast %8 : vector<1xf32> to vector<1x1xf32>
    %cst_4 = arith.constant 7.812500e-03 : f32
    %10 = vector.broadcast %cst_4 : f32 to vector<1x1xf32>
    %11 = arith.mulf %9, %10 : vector<1x1xf32>
    %cst_5 = arith.constant 9.99999997E-7 : f32
    %12 = vector.broadcast %cst_5 : f32 to vector<1x1xf32>
    %13 = arith.addf %11, %12 : vector<1x1xf32>
    %14 = vector.broadcast %13 : vector<1x1xf32> to vector<1x128xf32>
    %15 = arith.divf %7, %14 : vector<1x128xf32>
    %c0_6 = arith.constant 0 : index
    %c0_7 = arith.constant 0 : index
    %c0_8 = arith.constant 0 : index
    %16 = vector.load %arg2[%c0_6, %c0_7, %c0_8] : memref<1x1x128xf32, #tpu.memory_space<vmem>>, vector<1x1x128xf32>
    %17 = vector.shape_cast %16 : vector<1x1x128xf32> to vector<1x128xf32>
    %18 = arith.mulf %17, %15 : vector<1x128xf32>
    %cst_9 = arith.constant 1.000000e+00 : f32
    %19 = vector.broadcast %cst_9 : f32 to vector<1x128xf32>
    %20 = arith.addf %18, %19 : vector<1x128xf32>
    %c0_10 = arith.constant 0 : index
    %c0_11 = arith.constant 0 : index
    %c0_12 = arith.constant 0 : index
    %21 = vector.load %arg1[%c0_10, %c0_11, %c0_12] : memref<1x256x128xf32, #tpu.memory_space<vmem>>, vector<1x256x128xf32>
    %22 = vector.shape_cast %21 : vector<1x256x128xf32> to vector<256x128xf32>
    %23 = vector.broadcast %20 : vector<1x128xf32> to vector<256x128xf32>
    %24 = arith.mulf %22, %23 : vector<256x128xf32>
    %c0_13 = arith.constant 0 : index
    %c0_14 = arith.constant 0 : index
    %c0_15 = arith.constant 0 : index
    %25 = vector.load %arg3[%c0_13, %c0_14, %c0_15] : memref<1x1x128xf32, #tpu.memory_space<vmem>>, vector<1x1x128xf32>
    %26 = vector.shape_cast %25 : vector<1x1x128xf32> to vector<1x128xf32>
    %27 = vector.broadcast %26 : vector<1x128xf32> to vector<256x128xf32>
    %28 = arith.addf %24, %27 : vector<256x128xf32>
    %c0_16 = arith.constant 0 : index
    %c0_17 = arith.constant 0 : index
    %c0_18 = arith.constant 0 : index
    %29 = vector.load %arg4[%c0_16, %c0_17, %c0_18] : memref<1x256x128xf32, #tpu.memory_space<vmem>>, vector<1x256x128xf32>
    %30 = vector.shape_cast %29 : vector<1x256x128xf32> to vector<256x128xf32>
    %31 = vector.shape_cast %28 : vector<256x128xf32> to vector<1x256x128xf32>
    tpu.vector_store %arg4[%c0_16, %c0_17, %c0_18], %31 {strides = array<i32>} : memref<1x256x128xf32, #tpu.memory_space<vmem>>, vector<1x256x128xf32>,
    return
  }
  func.func @transform_0(%arg0: i32) -> (i32, i32, i32) {
    %c0_i32 = arith.constant 0 : i32
    %c0_i32_0 = arith.constant 0 : i32
    %c0_i32_1 = arith.constant 0 : i32
    return %arg0, %c0_i32, %c0_i32_0 : i32, i32, i32
  }
  func.func @transform_1(%arg0: i32) -> (i32, i32, i32) {
    %c0_i32 = arith.constant 0 : i32
    %c0_i32_0 = arith.constant 0 : i32
    %c0_i32_1 = arith.constant 0 : i32
    %c0_i32_2 = arith.constant 0 : i32
    return %c0_i32, %c0_i32_0, %c0_i32_1 : i32, i32, i32
  }
  func.func @transform_2(%arg0: i32) -> (i32, i32, i32) {
    %c0_i32 = arith.constant 0 : i32
    %c0_i32_0 = arith.constant 0 : i32
    %c0_i32_1 = arith.constant 0 : i32
    %c0_i32_2 = arith.constant 0 : i32
    return %c0_i32, %c0_i32_0, %c0_i32_1 : i32, i32, i32
  }
  func.func @transform_3(%arg0: i32) -> (i32, i32, i32) {
    %c0_i32 = arith.constant 0 : i32
    %c0_i32_0 = arith.constant 0 : i32
    %c0_i32_1 = arith.constant 0 : i32
    return %arg0, %c0_i32, %c0_i32_0 : i32, i32, i32
  }
}

</mosaic_0001>

<llo_original>
// kernel: tpu_custom_call.1
$region0: #{tpu_custom_call.1}
  #allocation0 [shape = 'u32[]', space=smem, size = 0x4, offset = 0x4, fixed_abs, tag = 'smem constant byte address 0x4 - core index']
  #allocation1 [shape = 'u32[144,128]{1,0:T(1,128)}', space=vmem, size = 0x12000, scoped, tag = 'internal scratch']
  %s0 = inlined_call_operand.hbm [shape: f32[2,256,128], index: 0, kind: input, shape index: {}]
  %s1 = inlined_call_operand.vmem [shape: f32[1,1,128], index: 1, kind: input, shape index: {}]
  %s2 = inlined_call_operand.vmem [shape: f32[1,1,128], index: 2, kind: input, shape index: {}]
  %s3 = inlined_call_operand.hbm [shape: f32[2,256,128], index: 3, kind: output, shape index: {}]
  %s4 = sld [smem:[#allocation0]]
  $region49: #{tpu_custom_call.1} parent=0
    _
  %s6 = ssub.s32 1, %s4
  %s7 = scalar_select 0, %s6, %s4
  $region1: #{tpu_custom_call.1} parent=0
    #allocation2 [shape = 'u8[262144]{0}', space=vmem, size = 0x40000, scoped, tag = 'input window, operand 0']
    #allocation3 [shape = 's32[2]{0}', space=sflag, size = 0x8, scoped, tag = 'scoped memory for tpu_custom_call.1']
    #allocation4 [shape = 's32[2]{0}', space=sflag, size = 0x8, scoped, tag = 'scoped memory for tpu_custom_call.1']
    #allocation5 [shape = 'u8[262144]{0}', space=vmem, size = 0x40000, scoped, tag = 'output window, operand 0']
    %8 = vsyncpa [#allocation3], 0
    %s9 = scalar_lea.sflag [#allocation3], 1
    %10 = vsyncpa %s9, 0
    %11 = vsyncpa [#allocation4], 0
    %s12 = scalar_lea.sflag [#allocation4], 1
    %13 = vsyncpa %s12, 0
    loop: start=0, step=1, limit=4
    $region2: #{tpu_custom_call.1} parent=1 // loop_pre_header
      _
    $region3: #{tpu_custom_call.1} parent=1 // loop_header
      %s15 = sphi 0, %s19
      %p16 = scmp.ge.s32.totalorder %s15, 4
      %s25 = sphi 0, %s27
      %s28 = sphi 0, %s25
      %s29 = sphi 0, %s28
      %s45 = sphi 0, %s29
      %s49 = sphi 0, %s49
      %s51 = sphi 0, %s49
      %s52 = sphi 0, %s51
      %s66 = sphi 0, %s52
      %s70 = sphi 0, %s70
      %s72 = sphi 0, %s70
      %s73 = sphi 0, %s72
      %s87 = sphi 0, %s73
      %s93 = sphi 0, %s95
      %s96 = sphi 0, %s93
      %s97 = sphi 0, %s96
      %s113 = sphi 0, %s97
    $region4: #{tpu_custom_call.1} parent=1 // loop_header_branch
      %18 = sbr.rel (%p16) target = $region8
    $region5: #{tpu_custom_call.1} parent=1 // loop_body
      %s20 = ssub.s32 %s15, 1
      %s21 = ssub.s32 %s15, 2
      %s22 = sadd.s32 %s15, 1
      %s23 = ssub.s32 %s15, %s22
      %p24 = scmp.eq.s32.totalorder %s23, 0
      %s26 = sadd.s32 %s25, 1
      %s27 = scalar_select %p24, %s25, %s26
      %p30 = pneg %p24
      %p31 = scmp.eq.s32.totalorder %s15, 1
      %p32 = por %p30, %p31
      %p33 = scmp.ne.s32.totalorder %s25, %s28
      %p34 = scmp.eq.s32.totalorder %s15, 0
      %p35 = por %p33, %p34
      %p36 = scmp.ne.s32.totalorder %s25, %s28
      %p37 = scmp.eq.s32.totalorder %s20, 1
      %p38 = por %p36, %p37
      %p39 = scmp.ne.s32.totalorder %s28, %s29
      %p40 = scmp.eq.s32.totalorder %s20, 0
      %p41 = por %p39, %p40
      %p42 = scmp.ne.s32.totalorder %s28, %s29
      %p43 = scmp.eq.s32.totalorder %s21, 1
      %p44 = por %p42, %p43
      %p46 = scmp.ne.s32.totalorder %s29, %s45
      %p47 = scmp.eq.s32.totalorder %s21, 0
      %p48 = por %p46, %p47
      %s50 = sadd.s32 %s49, 1
      %p53 = scmp.eq.s32.totalorder %s15, 1
      %p54 = scmp.ne.s32.totalorder %s49, %s51
      %p55 = scmp.eq.s32.totalorder %s15, 0
      %p56 = por %p54, %p55
      %p57 = scmp.ne.s32.totalorder %s49, %s51
      %p58 = scmp.eq.s32.totalorder %s20, 1
      %p59 = por %p57, %p58
      %p60 = scmp.ne.s32.totalorder %s51, %s52
      %p61 = scmp.eq.s32.totalorder %s20, 0
      %p62 = por %p60, %p61
      %p63 = scmp.ne.s32.totalorder %s51, %s52
      %p64 = scmp.eq.s32.totalorder %s21, 1
      %p65 = por %p63, %p64
      %p67 = scmp.ne.s32.totalorder %s52, %s66
      %p68 = scmp.eq.s32.totalorder %s21, 0
      %p69 = por %p67, %p68
      %s71 = sadd.s32 %s70, 1
      %p74 = scmp.eq.s32.totalorder %s15, 1
      %p75 = scmp.ne.s32.totalorder %s70, %s72
      %p76 = scmp.eq.s32.totalorder %s15, 0
      %p77 = por %p75, %p76
      %p78 = scmp.ne.s32.totalorder %s70, %s72
      %p79 = scmp.eq.s32.totalorder %s20, 1
      %p80 = por %p78, %p79
      %p81 = scmp.ne.s32.totalorder %s72, %s73
      %p82 = scmp.eq.s32.totalorder %s20, 0
      %p83 = por %p81, %p82
      %p84 = scmp.ne.s32.totalorder %s72, %s73
      %p85 = scmp.eq.s32.totalorder %s21, 1
      %p86 = por %p84, %p85
      %p88 = scmp.ne.s32.totalorder %s73, %s87
      %p89 = scmp.eq.s32.totalorder %s21, 0
      %p90 = por %p88, %p89
      %s91 = ssub.s32 %s15, %s22
      %p92 = scmp.eq.s32.totalorder %s91, 0
      %s94 = sadd.s32 %s93, 1
      %s95 = scalar_select %p92, %s93, %s94
      %p98 = pneg %p92
      %p99 = scmp.eq.s32.totalorder %s15, 1
      %p100 = por %p98, %p99
      %p101 = scmp.ne.s32.totalorder %s93, %s96
      %p102 = scmp.eq.s32.totalorder %s15, 0
      %p103 = por %p101, %p102
      %p104 = scmp.ne.s32.totalorder %s93, %s96
      %p105 = scmp.eq.s32.totalorder %s20, 1
      %p106 = por %p104, %p105
      %p107 = scmp.ne.s32.totalorder %s96, %s97
      %p108 = scmp.eq.s32.totalorder %s20, 0
      %p109 = por %p107, %p108
      %p110 = scmp.ne.s32.totalorder %s96, %s97
      %p111 = scmp.eq.s32.totalorder %s21, 1
      %p112 = por %p110, %p111
      %p114 = scmp.ne.s32.totalorder %s97, %s113
      %p115 = scmp.eq.s32.totalorder %s21, 0
      %p116 = por %p114, %p115
      %p117 = scmp.le.s32.totalorder 1, %s15
      %p118 = scmp.lt.s32.totalorder %s15, 3
      %p119 = pnand %p117, %p118
      %p120 = pneg %p119
      // Predicated region
      $region9: #{tpu_custom_call.1} parent=5 // pred_check
        _
      $region10: #{tpu_custom_call.1} parent=5 // pred_check_branch
        %122 = sbr.rel (%p119) target = $region12
      $region11: #{tpu_custom_call.1} parent=5 // pred_region
        %s123 = ssub.s32 %s15, 1
        // Predicated region
        $region13: #{tpu_custom_call.1} parent=11 // pred_check
          %p124 = pneg %p62
        $region14: #{tpu_custom_call.1} parent=11 // pred_check_branch
          %126 = sbr.rel (%p124) target = $region16
        $region15: #{tpu_custom_call.1} parent=11 // pred_region
          _
        $region16: #{tpu_custom_call.1} parent=11 // pred_fallthru
          _
        // Predicated region
        $region17: #{tpu_custom_call.1} parent=11 // pred_check
          %p127 = pneg %p83
        $region18: #{tpu_custom_call.1} parent=11 // pred_check_branch
          %129 = sbr.rel (%p127) target = $region20
        $region19: #{tpu_custom_call.1} parent=11 // pred_region
          _
        $region20: #{tpu_custom_call.1} parent=11 // pred_fallthru
          _
      $region12: #{tpu_custom_call.1} parent=5 // pred_fallthru
        _
      %p130 = scmp.lt.s32.totalorder %s15, 2
      // Predicated region
      $region21: #{tpu_custom_call.1} parent=5 // pred_check
        %p131 = pneg %p130
      $region22: #{tpu_custom_call.1} parent=5 // pred_check_branch
        %133 = sbr.rel (%p131) target = $region24
      $region23: #{tpu_custom_call.1} parent=5 // pred_region
        // Predicated region
        $region25: #{tpu_custom_call.1} parent=23 // pred_check
          %p134 = pneg %p35
        $region26: #{tpu_custom_call.1} parent=23 // pred_check_branch
          %136 = sbr.rel (%p134) target = $region28
        $region27: #{tpu_custom_call.1} parent=23 // pred_region
          %s137 = sand.u32 %s25, 1
          %s138 = scalar_lea.sflag [#allocation3], %s137
          %s139 = sand.u32 %s25, 1
          %s140 = smul.addr %s139, 256
          %s141 = scalar_lea.vmem [#allocation2], %s140
          %s143 = ssub.s32 4096, 4096
          %144 = vsyncadd %s138, %s143
          %s145 = smul.addr %s15, 32
          %s146 = smul.addr %s145, 128
          %s147 = scalar_lea.hbm %s0, %s146
          %s148 = sshll.u32 %s141, 4
          %s149 = int_to_ptr.vmem [resolvable:$true] %s148
          %154 = dma.hbm_to_vmem [thread:$0]  %s147, 4096, %s149, %s138, 128, 128, 8
        $region28: #{tpu_custom_call.1} parent=23 // pred_fallthru
          _
      $region24: #{tpu_custom_call.1} parent=5 // pred_fallthru
        _
      %p155 = scmp.le.s32.totalorder 1, %s15
      %p156 = scmp.lt.s32.totalorder %s15, 3
      %p157 = pnand %p155, %p156
      %p158 = pneg %p157
      // Predicated region
      $region29: #{tpu_custom_call.1} parent=5 // pred_check
        _
      $region30: #{tpu_custom_call.1} parent=5 // pred_check_branch
        %160 = sbr.rel (%p157) target = $region32
      $region31: #{tpu_custom_call.1} parent=5 // pred_region
        %s161 = ssub.s32 %s15, 1
        %s162 = sand.u32 %s28, 1
        %s163 = scalar_lea.sflag [#allocation3], %s162
        %s164 = sand.u32 %s28, 1
        %s165 = smul.addr %s164, 256
        %s166 = scalar_lea.vmem [#allocation2], %s165
        // Predicated region
        $region33: #{tpu_custom_call.1} parent=31 // pred_check
          %p167 = pneg %p41
        $region34: #{tpu_custom_call.1} parent=31 // pred_check_branch
          %169 = sbr.rel (%p167) target = $region36
        $region35: #{tpu_custom_call.1} parent=31 // pred_region
          %170 = dma.done %s163, 4096
        $region36: #{tpu_custom_call.1} parent=31 // pred_fallthru
          _
        %s171 = sand.u32 %s28, 1
        %s172 = scalar_lea.sflag [#allocation3], %s171
        %s173 = sand.u32 %s28, 1
        %s174 = smul.addr %s173, 256
        %s175 = scalar_lea.vmem [#allocation2], %s174
        %p176 = pneg %p41
        %p177 = pneg %p38
        %p178 = pneg %p62
        %p179 = pneg %p59
        %p180 = pneg %p83
        %p181 = pneg %p80
        %p182 = pneg %p109
        %p183 = pneg %p106
        %s184 = sand.u32 %s96, 1
        %s185 = scalar_lea.sflag [#allocation4], %s184
        %s186 = sand.u32 %s96, 1
        %s187 = smul.addr %s186, 256
        %s188 = scalar_lea.vmem [#allocation5], %s187
        %v189 = vld [vmem:[%s166] sm:$0xff]
        %v190 = vld [vmem:[%s166 + $0x8] sm:$0xff]
        %v191 = vld [vmem:[%s166 + $0x10] sm:$0xff]
        %v192 = vld [vmem:[%s166 + $0x18] sm:$0xff]
        %v193 = vld [vmem:[%s166 + $0x20] sm:$0xff]
        %v194 = vld [vmem:[%s166 + $0x28] sm:$0xff]
        %v195 = vld [vmem:[%s166 + $0x30] sm:$0xff]
        %v196 = vld [vmem:[%s166 + $0x38] sm:$0xff]
        %v197 = vld [vmem:[%s166 + $0x40] sm:$0xff]
        %v198 = vld [vmem:[%s166 + $0x48] sm:$0xff]
        %v199 = vld [vmem:[%s166 + $0x50] sm:$0xff]
        %v200 = vld [vmem:[%s166 + $0x58] sm:$0xff]
        %v201 = vld [vmem:[%s166 + $0x60] sm:$0xff]
        %v202 = vld [vmem:[%s166 + $0x68] sm:$0xff]
        %v203 = vld [vmem:[%s166 + $0x70] sm:$0xff]
        %v204 = vld [vmem:[%s166 + $0x78] sm:$0xff]
        %v205 = vld [vmem:[%s166 + $0x80] sm:$0xff]
        %v206 = vld [vmem:[%s166 + $0x88] sm:$0xff]
        %v207 = vld [vmem:[%s166 + $0x90] sm:$0xff]
        %v208 = vld [vmem:[%s166 + $0x98] sm:$0xff]
        %v209 = vld [vmem:[%s166 + $0xa0] sm:$0xff]
        %v210 = vld [vmem:[%s166 + $0xa8] sm:$0xff]
        %v211 = vld [vmem:[%s166 + $0xb0] sm:$0xff]
        %v212 = vld [vmem:[%s166 + $0xb8] sm:$0xff]
        %v213 = vld [vmem:[%s166 + $0xc0] sm:$0xff]
        %v214 = vld [vmem:[%s166 + $0xc8] sm:$0xff]
        %v215 = vld [vmem:[%s166 + $0xd0] sm:$0xff]
        %v216 = vld [vmem:[%s166 + $0xd8] sm:$0xff]
        %v217 = vld [vmem:[%s166 + $0xe0] sm:$0xff]
        %v218 = vld [vmem:[%s166 + $0xe8] sm:$0xff]
        %v219 = vld [vmem:[%s166 + $0xf0] sm:$0xff]
        %v220 = vld [vmem:[%s166 + $0xf8] sm:$0xff]
        %v221 = vmul.f32 %v189, %v189
        %v222 = vmul.f32 %v190, %v190
        %v223 = vmul.f32 %v191, %v191
        %v224 = vmul.f32 %v192, %v192
        %v225 = vmul.f32 %v193, %v193
        %v226 = vmul.f32 %v194, %v194
        %v227 = vmul.f32 %v195, %v195
        %v228 = vmul.f32 %v196, %v196
        %v229 = vmul.f32 %v197, %v197
        %v230 = vmul.f32 %v198, %v198
        %v231 = vmul.f32 %v199, %v199
        %v232 = vmul.f32 %v200, %v200
        %v233 = vmul.f32 %v201, %v201
        %v234 = vmul.f32 %v202, %v202
        %v235 = vmul.f32 %v203, %v203
        %v236 = vmul.f32 %v204, %v204
        %v237 = vmul.f32 %v205, %v205
        %v238 = vmul.f32 %v206, %v206
        %v239 = vmul.f32 %v207, %v207
        %v240 = vmul.f32 %v208, %v208
        %v241 = vmul.f32 %v209, %v209
        %v242 = vmul.f32 %v210, %v210
        %v243 = vmul.f32 %v211, %v211
        %v244 = vmul.f32 %v212, %v212
        %v245 = vmul.f32 %v213, %v213
        %v246 = vmul.f32 %v214, %v214
        %v247 = vmul.f32 %v215, %v215
        %v248 = vmul.f32 %v216, %v216
        %v249 = vmul.f32 %v217, %v217
        %v250 = vmul.f32 %v218, %v218
        %v251 = vmul.f32 %v219, %v219
        %v252 = vmul.f32 %v220, %v220
        %v253 = vadd.f32 %v221, %v222
        %v254 = vadd.f32 %v253, %v223
        %v255 = vadd.f32 %v254, %v224
        %v256 = vadd.f32 %v255, %v225
        %v257 = vadd.f32 %v256, %v226
        %v258 = vadd.f32 %v257, %v227
        %v259 = vadd.f32 %v258, %v228
        %v260 = vadd.f32 %v259, %v229
        %v261 = vadd.f32 %v260, %v230
        %v262 = vadd.f32 %v261, %v231
        %v263 = vadd.f32 %v262, %v232
        %v264 = vadd.f32 %v263, %v233
        %v265 = vadd.f32 %v264, %v234
        %v266 = vadd.f32 %v265, %v235
        %v267 = vadd.f32 %v266, %v236
        %v268 = vadd.f32 %v267, %v237
        %v269 = vadd.f32 %v268, %v238
        %v270 = vadd.f32 %v269, %v239
        %v271 = vadd.f32 %v270, %v240
        %v272 = vadd.f32 %v271, %v241
        %v273 = vadd.f32 %v272, %v242
        %v274 = vadd.f32 %v273, %v243
        %v275 = vadd.f32 %v274, %v244
        %v276 = vadd.f32 %v275, %v245
        %v277 = vadd.f32 %v276, %v246
        %v278 = vadd.f32 %v277, %v247
        %v279 = vadd.f32 %v278, %v248
        %v280 = vadd.f32 %v279, %v249
        %v281 = vadd.f32 %v280, %v250
        %v282 = vadd.f32 %v281, %v251
        %v283 = vadd.f32 %v282, %v252
        %v284 = vrot.slane %v283, 4
        %v285 = vadd.f32 %v283, %v284
        %v286 = vrot.slane %v285, 2
        %v287 = vadd.f32 %v285, %v286
        %v288 = vrot.slane %v287, 1
        %v289 = vadd.f32 %v287, %v288
        %v290 = vrsqrt.pop %v289
        %v291 = vmul.f32 %v289, %v290
        %vm292 = vcmp.eq.f32.partialorder %v289, inf
        %v293 = vsel %vm292, %v289, %v291
        %vm294 = vcmp.eq.f32.partialorder %v289, 0.0
        %v295 = vand.u32 %v289, 2147483648
        %v296 = vsel %vm294, %v295, %v293
        %297 = vadd.xlane.f32.xlu0 %v296
        %v298 = vpop.xlane.xlu0 %297
        %v299 = vmul.f32 %v298, 0.0078125
        %v300 = vadd.f32 %v299, 1e-06
        %v301 = vrcp.pop %v300
        %v302 = vmul.f32 %v296, %v301
        %v303 = vld [vmem:[%s1] sm:$0x1]
        %v304 = vmul.f32 %v303, %v302
        %v305 = vadd.f32 %v304, 1.0
        %v307 = vlaneseq
        %v308 = vshrl.u32 %v307, 7
        %v309 = vsub.s32 0, %v308
        %v310 = vrot.slane %v305, %v309
        %v312 = vmul.f32 %v189, %v310
        %v313 = vmul.f32 %v190, %v310
        %v314 = vmul.f32 %v191, %v310
        %v315 = vmul.f32 %v192, %v310
        %v316 = vmul.f32 %v193, %v310
        %v317 = vmul.f32 %v194, %v310
        %v318 = vmul.f32 %v195, %v310
        %v319 = vmul.f32 %v196, %v310
        %v320 = vmul.f32 %v197, %v310
        %v321 = vmul.f32 %v198, %v310
        %v322 = vmul.f32 %v199, %v310
        %v323 = vmul.f32 %v200, %v310
        %v324 = vmul.f32 %v201, %v310
        %v325 = vmul.f32 %v202, %v310
        %v326 = vmul.f32 %v203, %v310
        %v327 = vmul.f32 %v204, %v310
        %v328 = vmul.f32 %v205, %v310
        %v329 = vmul.f32 %v206, %v310
        %v330 = vmul.f32 %v207, %v310
        %v331 = vmul.f32 %v208, %v310
        %v332 = vmul.f32 %v209, %v310
        %v333 = vmul.f32 %v210, %v310
        %v334 = vmul.f32 %v211, %v310
        %v335 = vmul.f32 %v212, %v310
        %v336 = vmul.f32 %v213, %v310
        %v337 = vmul.f32 %v214, %v310
        %v338 = vmul.f32 %v215, %v310
        %v339 = vmul.f32 %v216, %v310
        %v340 = vmul.f32 %v217, %v310
        %v341 = vmul.f32 %v218, %v310
        %v342 = vmul.f32 %v219, %v310
        %v343 = vmul.f32 %v220, %v310
        %v344 = vld [vmem:[%s2] sm:$0x1]
        %v346 = vlaneseq
        %v347 = vshrl.u32 %v346, 7
        %v348 = vsub.s32 0, %v347
        %v349 = vrot.slane %v344, %v348
        %v351 = vadd.f32 %v312, %v349
        %v352 = vadd.f32 %v313, %v349
        %v353 = vadd.f32 %v314, %v349
        %v354 = vadd.f32 %v315, %v349
        %v355 = vadd.f32 %v316, %v349
        %v356 = vadd.f32 %v317, %v349
        %v357 = vadd.f32 %v318, %v349
        %v358 = vadd.f32 %v319, %v349
        %v359 = vadd.f32 %v320, %v349
        %v360 = vadd.f32 %v321, %v349
        %v361 = vadd.f32 %v322, %v349
        %v362 = vadd.f32 %v323, %v349
        %v363 = vadd.f32 %v324, %v349
        %v364 = vadd.f32 %v325, %v349
        %v365 = vadd.f32 %v326, %v349
        %v366 = vadd.f32 %v327, %v349
        %v367 = vadd.f32 %v328, %v349
        %v368 = vadd.f32 %v329, %v349
        %v369 = vadd.f32 %v330, %v349
        %v370 = vadd.f32 %v331, %v349
        %v371 = vadd.f32 %v332, %v349
        %v372 = vadd.f32 %v333, %v349
        %v373 = vadd.f32 %v334, %v349
        %v374 = vadd.f32 %v335, %v349
        %v375 = vadd.f32 %v336, %v349
        %v376 = vadd.f32 %v337, %v349
        %v377 = vadd.f32 %v338, %v349
        %v378 = vadd.f32 %v339, %v349
        %v379 = vadd.f32 %v340, %v349
        %v380 = vadd.f32 %v341, %v349
        %v381 = vadd.f32 %v342, %v349
        %v382 = vadd.f32 %v343, %v349
        %383 = vst [vmem:[%s188] sm:$0xff] %v351
        %384 = vst [vmem:[%s188 + $0x8] sm:$0xff] %v352
        %385 = vst [vmem:[%s188 + $0x10] sm:$0xff] %v353
        %386 = vst [vmem:[%s188 + $0x18] sm:$0xff] %v354
        %387 = vst [vmem:[%s188 + $0x20] sm:$0xff] %v355
        %388 = vst [vmem:[%s188 + $0x28] sm:$0xff] %v356
        %389 = vst [vmem:[%s188 + $0x30] sm:$0xff] %v357
        %390 = vst [vmem:[%s188 + $0x38] sm:$0xff] %v358
        %391 = vst [vmem:[%s188 + $0x40] sm:$0xff] %v359
        %392 = vst [vmem:[%s188 + $0x48] sm:$0xff] %v360
        %393 = vst [vmem:[%s188 + $0x50] sm:$0xff] %v361
        %394 = vst [vmem:[%s188 + $0x58] sm:$0xff] %v362
        %395 = vst [vmem:[%s188 + $0x60] sm:$0xff] %v363
        %396 = vst [vmem:[%s188 + $0x68] sm:$0xff] %v364
        %397 = vst [vmem:[%s188 + $0x70] sm:$0xff] %v365
        %398 = vst [vmem:[%s188 + $0x78] sm:$0xff] %v366
        %399 = vst [vmem:[%s188 + $0x80] sm:$0xff] %v367
        %400 = vst [vmem:[%s188 + $0x88] sm:$0xff] %v368
        %401 = vst [vmem:[%s188 + $0x90] sm:$0xff] %v369
        %402 = vst [vmem:[%s188 + $0x98] sm:$0xff] %v370
        %403 = vst [vmem:[%s188 + $0xa0] sm:$0xff] %v371
        %404 = vst [vmem:[%s188 + $0xa8] sm:$0xff] %v372
        %405 = vst [vmem:[%s188 + $0xb0] sm:$0xff] %v373
        %406 = vst [vmem:[%s188 + $0xb8] sm:$0xff] %v374
        %407 = vst [vmem:[%s188 + $0xc0] sm:$0xff] %v375
        %408 = vst [vmem:[%s188 + $0xc8] sm:$0xff] %v376
        %409 = vst [vmem:[%s188 + $0xd0] sm:$0xff] %v377
        %410 = vst [vmem:[%s188 + $0xd8] sm:$0xff] %v378
        %411 = vst [vmem:[%s188 + $0xe0] sm:$0xff] %v379
        %412 = vst [vmem:[%s188 + $0xe8] sm:$0xff] %v380
        %413 = vst [vmem:[%s188 + $0xf0] sm:$0xff] %v381
        %414 = vst [vmem:[%s188 + $0xf8] sm:$0xff] %v382
        %s415 = sand.u32 %s96, 1
        %s416 = scalar_lea.sflag [#allocation4], %s415
        %s417 = sand.u32 %s96, 1
        %s418 = smul.addr %s417, 256
        %s419 = scalar_lea.vmem [#allocation5], %s418
        // Predicated region
        $region37: #{tpu_custom_call.1} parent=31 // pred_check
          %p420 = pneg %p106
        $region38: #{tpu_custom_call.1} parent=31 // pred_check_branch
          %422 = sbr.rel (%p420) target = $region40
        $region39: #{tpu_custom_call.1} parent=31 // pred_region
          %s424 = ssub.s32 4096, 4096
          %425 = vsyncadd %s416, %s424
          %s426 = smul.addr %s20, 32
          %s427 = smul.addr %s426, 128
          %s428 = scalar_lea.hbm %s3, %s427
          %s429 = sshll.u32 %s419, 4
          %s430 = int_to_ptr.vmem [resolvable:$true] %s429
          %435 = dma.vmem_to_hbm [thread:$0]  %s430, 4096, %s428, %s416, 128, 128, 8
        $region40: #{tpu_custom_call.1} parent=31 // pred_fallthru
          _
      $region32: #{tpu_custom_call.1} parent=5 // pred_fallthru
        _
      %p436 = scmp.le.s32.totalorder 2, %s15
      // Predicated region
      $region41: #{tpu_custom_call.1} parent=5 // pred_check
        %p437 = pneg %p436
      $region42: #{tpu_custom_call.1} parent=5 // pred_check_branch
        %439 = sbr.rel (%p437) target = $region44
      $region43: #{tpu_custom_call.1} parent=5 // pred_region
        %s440 = ssub.s32 %s15, 2
        // Predicated region
        $region45: #{tpu_custom_call.1} parent=43 // pred_check
          %p441 = pneg %p112
        $region46: #{tpu_custom_call.1} parent=43 // pred_check_branch
          %443 = sbr.rel (%p441) target = $region48
        $region47: #{tpu_custom_call.1} parent=43 // pred_region
          %s444 = sand.u32 %s97, 1
          %s445 = scalar_lea.sflag [#allocation4], %s444
          %s446 = sand.u32 %s97, 1
          %s447 = smul.addr %s446, 256
          %s448 = scalar_lea.vmem [#allocation5], %s447
          %449 = dma.done %s445, 4096
        $region48: #{tpu_custom_call.1} parent=43 // pred_fallthru
          _
      $region44: #{tpu_custom_call.1} parent=5 // pred_fallthru
        _
    $region6: #{tpu_custom_call.1} parent=1 // loop_footer
      %s19 = sadd.s32 1, %s15
    $region7: #{tpu_custom_call.1} parent=1 // loop_footer_branch
      %14 = sbr.rel target = $region3
    $region8: #{tpu_custom_call.1} parent=1 // loop_exit
      _
    %450 = vsyncpa [#allocation3], 1
    %s451 = scalar_lea.sflag [#allocation3], 1
    %452 = vsyncpa %s451, 1
    %453 = vsyncpa [#allocation4], 1
    %s454 = scalar_lea.sflag [#allocation4], 1
    %455 = vsyncpa %s454, 1

</llo_original>
